<compile_context>
chip_gen: v7x
topology: tpu7x:2x2x1
jax: 0.10.0
libtpu: 0.0.40
codegen_flags: <defaults>
</compile_context>

<pallas_src>
import functools

import jax
import jax.numpy as jnp
from jax.experimental import pallas as pl
from jax.experimental.pallas import tpu as pltpu

_LANE = 128        # lane width (last-dim alignment for the padded output)
_SUBLANE = 8       # sublane width (row-tile alignment, f32)
_MAX_TILE_N = 2048 # double-buffered x+out tiles at this size are ~2.5 MiB


def _round_up(x, m):
    return ((x + m - 1) // m) * m


def _pick_tile_n(n):
    """Row tile: large (amortize ~0.35us/grid-step) but at least 2 blocks so
    the 'parallel' grid axis can use both TensorCores on v7x."""
    if n <= _SUBLANE:
        return max(n, 1)
    half = _round_up(pl.cdiv(n, 2), _SUBLANE)
    return min(_MAX_TILE_N, half)


def _gmm_linear_kernel(x_ref, wt_ref, b_ref, o_ref):
    # x_ref : (TILE_N, H)      f32 row-tile of flattened hidden states
    # wt_ref: (H, O_pad)       bf16 pre-transposed weight (resident)
    # b_ref : (1, O_pad)       f32 bias, zero-padded (resident)
    # o_ref : (TILE_N, O_pad)  f32 lane-dense output tile
    #
    # In-register bf16 cast of x: HBM traffic stays f32-x + bf16-weight while
    # the MXU runs at native bf16 rate; accumulation is f32.
    x_bf = x_ref[...].astype(jnp.bfloat16)
    acc = jnp.dot(x_bf, wt_ref[...], preferred_element_type=jnp.float32)
    o_ref[...] = (acc + b_ref[...]).astype(o_ref.dtype)


@functools.partial(jax.jit, static_argnames=("out_features",))
def gmm_linear(x, wt_pad, b_pad, *, out_features):
    """y = x @ W.T + b, matching nn.Linear semantics.

    x:       (..., hiddens)     float32
    wt_pad:  (hiddens, O_pad)   bf16, pre-transposed, zero-padded on O only
    b_pad:   (1, O_pad)         f32, zero-padded on O
    returns  (..., out_features)
    """
    orig_shape = x.shape
    hiddens = orig_shape[-1]
    o_pad = wt_pad.shape[1]

    x2d = x.reshape(-1, hiddens)
    n = x2d.shape[0]
    if n == 0:  # empty batch guard
        return jnp.zeros((*orig_shape[:-1], out_features), x.dtype)

    tile_n = _pick_tile_n(n)
    grid = (pl.cdiv(n, tile_n),)   # ragged last block handled by Pallas

    cost = pl.CostEstimate(
        flops=2 * n * hiddens * o_pad,
        transcendentals=0,
        bytes_accessed=(4 * n * hiddens          # x (f32)
                        + 2 * hiddens * o_pad    # weight (bf16)
                        + 4 * o_pad              # bias
                        + 4 * n * o_pad),        # output (f32)
    )

    out = pl.pallas_call(
        _gmm_linear_kernel,
        out_shape=jax.ShapeDtypeStruct((n, o_pad), x.dtype),
        grid_spec=pl.GridSpec(
            grid=grid,
            in_specs=[
                # Full K extent in one block: no pad of x, no K grid axis.
                pl.BlockSpec((tile_n, hiddens), lambda i: (i, 0)),
                # Resident weight / bias (constant index_map, tiny).
                pl.BlockSpec((hiddens, o_pad), lambda i: (0, 0)),
                pl.BlockSpec((1, o_pad), lambda i: (0, 0)),
            ],
            out_specs=pl.BlockSpec((tile_n, o_pad), lambda i: (i, 0)),
        ),
        compiler_params=pltpu.CompilerParams(
            # Independent row-tiles -> v7x can shard the grid across its 2 TCs.
            dimension_semantics=("parallel",),
            # No vmem_limit_bytes: footprint <= ~2.5 MiB, defaults are ample.
        ),
        cost_estimate=cost,
    )(x2d, wt_pad, b_pad)

    # Un-pad the lanes to match nn.Linear exactly.  A fused GMM-head consumer
    # would read the padded slab directly and skip this copy.
    out = out[:, :out_features]
    return out.reshape(*orig_shape[:-1], out_features)


class MDRNNBase:
    """JAX port of _MDRNNBase: holds the gmm_linear parameters."""

    def __init__(self, latents, actions, hiddens, gaussians, key):
        self.latents = latents
        self.actions = actions
        self.hiddens = hiddens
        self.gaussians = gaussians
        out_features = (2 * latents + 1) * gaussians + 2
        self.out_features = out_features

        kw, kb = jax.random.split(key)
        # Deterministic init mimicking nn.Linear's uniform(-1/sqrt(H), 1/sqrt(H))
        bound = 1.0 / (hiddens ** 0.5)
        self.weight = jax.random.uniform(
            kw, (out_features, hiddens), jnp.float32, -bound, bound)
        self.bias = jax.random.uniform(
            kb, (out_features,), jnp.float32, -bound, bound)

        # Kernel-side parameter copies: pre-transposed, lane-padded on O only,
        # weight in bf16 (MXU-native, half HBM traffic); bias stays f32.
        o_pad = _round_up(out_features, _LANE)
        self.wt_pad = jnp.pad(
            self.weight.T, ((0, 0), (0, o_pad - out_features))
        ).astype(jnp.bfloat16)
        self.b_pad = jnp.pad(
            self.bias, (0, o_pad - out_features)).reshape(1, o_pad)

    def __call__(self, hidden_states):
        # hidden_states: (seq, batch, hiddens)
        return gmm_linear(hidden_states, self.wt_pad, self.b_pad,
                          out_features=self.out_features)


if __name__ == "__main__":
    latents, actions, hiddens, gaussians = 8, 2, 32, 5
    seq, batch = 8, 2

    key = jax.random.PRNGKey(0)
    k_mod, k_in = jax.random.split(key)

    model = MDRNNBase(latents, actions, hiddens, gaussians, k_mod)

    x = jax.random.normal(k_in, (seq, batch, hiddens), jnp.float32)

    out = jax.block_until_ready(model(x))
    assert out.shape == (seq, batch, (2 * latents + 1) * gaussians + 2)

    # Tight check against a bf16-quantized-operand reference (kernel does a
    # bf16 matmul with f32 accumulation).
    ref_bf16 = (x.astype(jnp.bfloat16).astype(jnp.float32)
                @ model.weight.T.astype(jnp.bfloat16).astype(jnp.float32)
                + model.bias)
    assert jnp.allclose(out, ref_bf16, atol=1e-3, rtol=1e-3)

    # Sanity check against the exact f32 nn.Linear (loose: bf16 rounding).
    ref_f32 = x @ model.weight.T + model.bias
    assert jnp.allclose(out, ref_f32, atol=1e-1, rtol=1e-1)

    print("KERNEL_OK")
</pallas_src>

<mosaic_0001>
module attributes {stable_mosaic.version = 11 : i64} {
  func.func @_gmm_linear_kernel(%arg0: i32, %arg1: memref<8x32xf32, #tpu.memory_space<vmem>>, %arg2: memref<32x128xbf16, #tpu.memory_space<vmem>>, %arg3: memref<1x128xf32, #tpu.memory_space<vmem>>, %arg4: memref<8x128xf32, #tpu.memory_space<vmem>>) attributes {dimension_semantics = [#tpu.dimension_semantics<parallel>], iteration_bounds = array<i64: 2>, scalar_prefetch = 0 : i64, scratch_operands = 0 : i64, tpu.core_type = #tpu.core_type<tc>, window_params = [{transform_indices = @transform_0, window_bounds = array<i64: 8, 32>}, {pipeline_mode = #tpu.pipeline_mode<synchronous>, transform_indices = @transform_1, window_bounds = array<i64: 32, 128>}, {pipeline_mode = #tpu.pipeline_mode<synchronous>, transform_indices = @transform_2, window_bounds = array<i64: 1, 128>}, {transform_indices = @transform_3, window_bounds = array<i64: 8, 128>}]} {
    %c0 = arith.constant 0 : index
    %c0_0 = arith.constant 0 : index
    %0 = vector.load %arg1[%c0, %c0_0] : memref<8x32xf32, #tpu.memory_space<vmem>>, vector<8x32xf32>
    %1 = arith.truncf %0 : vector<8x32xf32> to vector<8x32xbf16>
    %c0_1 = arith.constant 0 : index
    %c0_2 = arith.constant 0 : index
    %2 = vector.load %arg2[%c0_1, %c0_2] : memref<32x128xbf16, #tpu.memory_space<vmem>>, vector<32x128xbf16>
    %cst = arith.constant dense<0.000000e+00> : vector<8x128xf32>
    %3 = tpu.matmul %1, %2, %cst {dimension_numbers = #tpu.dot_dimension_numbers<[1], [0], [0], [1], [0, 0, 1, 1], [], []>} : vector<8x32xbf16>, vector<32x128xbf16>, vector<8x128xf32> -> vector<8x128xf32>
    %c0_3 = arith.constant 0 : index
    %c0_4 = arith.constant 0 : index
    %4 = vector.load %arg3[%c0_3, %c0_4] : memref<1x128xf32, #tpu.memory_space<vmem>>, vector<1x128xf32>
    %5 = vector.broadcast %4 : vector<1x128xf32> to vector<8x128xf32>
    %6 = arith.addf %3, %5 : vector<8x128xf32>
    %c0_5 = arith.constant 0 : index
    %c0_6 = arith.constant 0 : index
    %7 = vector.load %arg4[%c0_5, %c0_6] : memref<8x128xf32, #tpu.memory_space<vmem>>, vector<8x128xf32>
    tpu.vector_store %arg4[%c0_5, %c0_6], %6 {strides = array<i32>} : memref<8x128xf32, #tpu.memory_space<vmem>>, vector<8x128xf32>,
    return
  }
  func.func @transform_0(%arg0: i32) -> (i32, i32) {
    %c0_i32 = arith.constant 0 : i32
    %c0_i32_0 = arith.constant 0 : i32
    return %arg0, %c0_i32 : i32, i32
  }
  func.func @transform_1(%arg0: i32) -> (i32, i32) {
    %c0_i32 = arith.constant 0 : i32
    %c0_i32_0 = arith.constant 0 : i32
    %c0_i32_1 = arith.constant 0 : i32
    return %c0_i32, %c0_i32_0 : i32, i32
  }
  func.func @transform_2(%arg0: i32) -> (i32, i32) {
    %c0_i32 = arith.constant 0 : i32
    %c0_i32_0 = arith.constant 0 : i32
    %c0_i32_1 = arith.constant 0 : i32
    return %c0_i32, %c0_i32_0 : i32, i32
  }
  func.func @transform_3(%arg0: i32) -> (i32, i32) {
    %c0_i32 = arith.constant 0 : i32
    %c0_i32_0 = arith.constant 0 : i32
    return %arg0, %c0_i32 : i32, i32
  }
}

</mosaic_0001>

<llo_original>
// kernel: gmm_linear.1
$region0: #{gmm_linear.1}
  #allocation0 [shape = 'u32[]', space=smem, size = 0x4, offset = 0x4, fixed_abs, tag = 'smem constant byte address 0x4 - core index']
  #allocation1 [shape = 'u32[144,128]{1,0:T(1,128)}', space=vmem, size = 0x12000, scoped, tag = 'internal scratch']
  %s0 = inlined_call_operand.hbm [shape: f32[16,32], index: 0, kind: input, shape index: {}]
  %s1 = inlined_call_operand.hbm [shape: bf16[32,128], index: 1, kind: input, shape index: {}]
  %s2 = inlined_call_operand.vmem [shape: f32[1,128], index: 2, kind: input, shape index: {}]
  %s3 = inlined_call_operand.hbm [shape: f32[16,128], index: 3, kind: output, shape index: {}]
  %s4 = sld [smem:[#allocation0]]
  $region53: #{gmm_linear.1} parent=0
    _
  %s6 = ssub.s32 1, %s4
  %s7 = scalar_select 0, %s6, %s4
  $region1: #{gmm_linear.1} parent=0
    #allocation2 [shape = 'u8[8192]{0}', space=vmem, size = 0x2000, scoped, tag = 'input window, operand 0']
    #allocation3 [shape = 's32[2]{0}', space=sflag, size = 0x8, scoped, tag = 'scoped memory for gmm_linear.1']
    #allocation4 [shape = 's32[2]{0}', space=sflag, size = 0x8, scoped, tag = 'scoped memory for gmm_linear.1']
    #allocation5 [shape = 'u8[8192]{0}', space=vmem, size = 0x2000, scoped, tag = 'input window, operand 1, single buffered']
    #allocation6 [shape = 's32[1]{0}', space=sflag, size = 0x4, scoped, tag = 'scoped memory for gmm_linear.1']
    #allocation7 [shape = 'u8[8192]{0}', space=vmem, size = 0x2000, scoped, tag = 'output window, operand 0']
    %8 = vsyncpa [#allocation3], 0
    %s9 = scalar_lea.sflag [#allocation3], 1
    %10 = vsyncpa %s9, 0
    %11 = vsyncpa [#allocation6], 0
    %12 = vsyncpa [#allocation4], 0
    %s13 = scalar_lea.sflag [#allocation4], 1
    %14 = vsyncpa %s13, 0
    loop: start=0, step=1, limit=4
    $region2: #{gmm_linear.1} parent=1 // loop_pre_header
      _
    $region3: #{gmm_linear.1} parent=1 // loop_header
      %s16 = sphi 0, %s20
      %p17 = scmp.ge.s32.totalorder %s16, 4
      %s26 = sphi 0, %s28
      %s29 = sphi 0, %s26
      %s30 = sphi 0, %s29
      %s46 = sphi 0, %s30
      %s50 = sphi 0, %s50
      %s52 = sphi 0, %s50
      %s53 = sphi 0, %s52
      %s67 = sphi 0, %s53
      %s71 = sphi 0, %s71
      %s73 = sphi 0, %s71
      %s74 = sphi 0, %s73
      %s88 = sphi 0, %s74
      %s94 = sphi 0, %s96
      %s97 = sphi 0, %s94
      %s98 = sphi 0, %s97
      %s114 = sphi 0, %s98
    $region4: #{gmm_linear.1} parent=1 // loop_header_branch
      %19 = sbr.rel (%p17) target = $region8
    $region5: #{gmm_linear.1} parent=1 // loop_body
      %s21 = ssub.s32 %s16, 1
      %s22 = ssub.s32 %s16, 2
      %s23 = sadd.s32 %s16, 1
      %s24 = ssub.s32 %s16, %s23
      %p25 = scmp.eq.s32.totalorder %s24, 0
      %s27 = sadd.s32 %s26, 1
      %s28 = scalar_select %p25, %s26, %s27
      %p31 = pneg %p25
      %p32 = scmp.eq.s32.totalorder %s16, 1
      %p33 = por %p31, %p32
      %p34 = scmp.ne.s32.totalorder %s26, %s29
      %p35 = scmp.eq.s32.totalorder %s16, 0
      %p36 = por %p34, %p35
      %p37 = scmp.ne.s32.totalorder %s26, %s29
      %p38 = scmp.eq.s32.totalorder %s21, 1
      %p39 = por %p37, %p38
      %p40 = scmp.ne.s32.totalorder %s29, %s30
      %p41 = scmp.eq.s32.totalorder %s21, 0
      %p42 = por %p40, %p41
      %p43 = scmp.ne.s32.totalorder %s29, %s30
      %p44 = scmp.eq.s32.totalorder %s22, 1
      %p45 = por %p43, %p44
      %p47 = scmp.ne.s32.totalorder %s30, %s46
      %p48 = scmp.eq.s32.totalorder %s22, 0
      %p49 = por %p47, %p48
      %s51 = sadd.s32 %s50, 1
      %p54 = scmp.eq.s32.totalorder %s16, 1
      %p55 = scmp.ne.s32.totalorder %s50, %s52
      %p56 = scmp.eq.s32.totalorder %s16, 0
      %p57 = por %p55, %p56
      %p58 = scmp.ne.s32.totalorder %s50, %s52
      %p59 = scmp.eq.s32.totalorder %s21, 1
      %p60 = por %p58, %p59
      %p61 = scmp.ne.s32.totalorder %s52, %s53
      %p62 = scmp.eq.s32.totalorder %s21, 0
      %p63 = por %p61, %p62
      %p64 = scmp.ne.s32.totalorder %s52, %s53
      %p65 = scmp.eq.s32.totalorder %s22, 1
      %p66 = por %p64, %p65
      %p68 = scmp.ne.s32.totalorder %s53, %s67
      %p69 = scmp.eq.s32.totalorder %s22, 0
      %p70 = por %p68, %p69
      %s72 = sadd.s32 %s71, 1
      %p75 = scmp.eq.s32.totalorder %s16, 1
      %p76 = scmp.ne.s32.totalorder %s71, %s73
      %p77 = scmp.eq.s32.totalorder %s16, 0
      %p78 = por %p76, %p77
      %p79 = scmp.ne.s32.totalorder %s71, %s73
      %p80 = scmp.eq.s32.totalorder %s21, 1
      %p81 = por %p79, %p80
      %p82 = scmp.ne.s32.totalorder %s73, %s74
      %p83 = scmp.eq.s32.totalorder %s21, 0
      %p84 = por %p82, %p83
      %p85 = scmp.ne.s32.totalorder %s73, %s74
      %p86 = scmp.eq.s32.totalorder %s22, 1
      %p87 = por %p85, %p86
      %p89 = scmp.ne.s32.totalorder %s74, %s88
      %p90 = scmp.eq.s32.totalorder %s22, 0
      %p91 = por %p89, %p90
      %s92 = ssub.s32 %s16, %s23
      %p93 = scmp.eq.s32.totalorder %s92, 0
      %s95 = sadd.s32 %s94, 1
      %s96 = scalar_select %p93, %s94, %s95
      %p99 = pneg %p93
      %p100 = scmp.eq.s32.totalorder %s16, 1
      %p101 = por %p99, %p100
      %p102 = scmp.ne.s32.totalorder %s94, %s97
      %p103 = scmp.eq.s32.totalorder %s16, 0
      %p104 = por %p102, %p103
      %p105 = scmp.ne.s32.totalorder %s94, %s97
      %p106 = scmp.eq.s32.totalorder %s21, 1
      %p107 = por %p105, %p106
      %p108 = scmp.ne.s32.totalorder %s97, %s98
      %p109 = scmp.eq.s32.totalorder %s21, 0
      %p110 = por %p108, %p109
      %p111 = scmp.ne.s32.totalorder %s97, %s98
      %p112 = scmp.eq.s32.totalorder %s22, 1
      %p113 = por %p111, %p112
      %p115 = scmp.ne.s32.totalorder %s98, %s114
      %p116 = scmp.eq.s32.totalorder %s22, 0
      %p117 = por %p115, %p116
      %p118 = scmp.le.s32.totalorder 1, %s16
      %p119 = scmp.lt.s32.totalorder %s16, 3
      %p120 = pnand %p118, %p119
      %p121 = pneg %p120
      // Predicated region
      $region9: #{gmm_linear.1} parent=5 // pred_check
        _
      $region10: #{gmm_linear.1} parent=5 // pred_check_branch
        %123 = sbr.rel (%p120) target = $region12
      $region11: #{gmm_linear.1} parent=5 // pred_region
        %s124 = ssub.s32 %s16, 1
        // Predicated region
        $region13: #{gmm_linear.1} parent=11 // pred_check
          %p125 = pneg %p63
        $region14: #{gmm_linear.1} parent=11 // pred_check_branch
          %127 = sbr.rel (%p125) target = $region16
        $region15: #{gmm_linear.1} parent=11 // pred_region
          %s129 = ssub.s32 256, 256
          %130 = vsyncadd [#allocation6], %s129
          %s131 = sshll.u32 [#allocation5], 4
          %s132 = int_to_ptr.vmem [resolvable:$true] %s131
          %137 = dma.hbm_to_vmem [thread:$0]  %s1, 256, %s132, [#allocation6], 64, 64, 4
        $region16: #{gmm_linear.1} parent=11 // pred_fallthru
          _
        // Predicated region
        $region17: #{gmm_linear.1} parent=11 // pred_check
          %p138 = pneg %p84
        $region18: #{gmm_linear.1} parent=11 // pred_check_branch
          %140 = sbr.rel (%p138) target = $region20
        $region19: #{gmm_linear.1} parent=11 // pred_region
          _
        $region20: #{gmm_linear.1} parent=11 // pred_fallthru
          _
      $region12: #{gmm_linear.1} parent=5 // pred_fallthru
        _
      %p141 = scmp.lt.s32.totalorder %s16, 2
      // Predicated region
      $region21: #{gmm_linear.1} parent=5 // pred_check
        %p142 = pneg %p141
      $region22: #{gmm_linear.1} parent=5 // pred_check_branch
        %144 = sbr.rel (%p142) target = $region24
      $region23: #{gmm_linear.1} parent=5 // pred_region
        // Predicated region
        $region25: #{gmm_linear.1} parent=23 // pred_check
          %p145 = pneg %p36
        $region26: #{gmm_linear.1} parent=23 // pred_check_branch
          %147 = sbr.rel (%p145) target = $region28
        $region27: #{gmm_linear.1} parent=23 // pred_region
          %s148 = sand.u32 %s26, 1
          %s149 = scalar_lea.sflag [#allocation3], %s148
          %s150 = sand.u32 %s26, 1
          %s151 = smul.addr %s150, 8
          %s152 = scalar_lea.vmem [#allocation2], %s151
          %s154 = ssub.s32 128, 128
          %155 = vsyncadd %s149, %s154
          %s156 = smul.addr %s16, 128
          %s157 = scalar_lea.hbm %s0, %s156
          %s159 = sshll.u32 %s152, 4
          %s160 = int_to_ptr.vmem [resolvable:$true] %s159
          %162 = dma.hbm_to_vmem [thread:$0]  %s157, 128, %s160, %s149
        $region28: #{gmm_linear.1} parent=23 // pred_fallthru
          _
      $region24: #{gmm_linear.1} parent=5 // pred_fallthru
        _
      %p163 = scmp.le.s32.totalorder 1, %s16
      %p164 = scmp.lt.s32.totalorder %s16, 3
      %p165 = pnand %p163, %p164
      %p166 = pneg %p165
      // Predicated region
      $region29: #{gmm_linear.1} parent=5 // pred_check
        _
      $region30: #{gmm_linear.1} parent=5 // pred_check_branch
        %168 = sbr.rel (%p165) target = $region32
      $region31: #{gmm_linear.1} parent=5 // pred_region
        %s169 = ssub.s32 %s16, 1
        %s170 = sand.u32 %s29, 1
        %s171 = scalar_lea.sflag [#allocation3], %s170
        %s172 = sand.u32 %s29, 1
        %s173 = smul.addr %s172, 8
        %s174 = scalar_lea.vmem [#allocation2], %s173
        // Predicated region
        $region33: #{gmm_linear.1} parent=31 // pred_check
          %p175 = pneg %p42
        $region34: #{gmm_linear.1} parent=31 // pred_check_branch
          %177 = sbr.rel (%p175) target = $region36
        $region35: #{gmm_linear.1} parent=31 // pred_region
          %178 = dma.done %s171, 128
        $region36: #{gmm_linear.1} parent=31 // pred_fallthru
          _
        // Predicated region
        $region37: #{gmm_linear.1} parent=31 // pred_check
          %p179 = pneg %p63
        $region38: #{gmm_linear.1} parent=31 // pred_check_branch
          %181 = sbr.rel (%p179) target = $region40
        $region39: #{gmm_linear.1} parent=31 // pred_region
          %182 = dma.done [#allocation6], 256
        $region40: #{gmm_linear.1} parent=31 // pred_fallthru
          _
        %s183 = sand.u32 %s29, 1
        %s184 = scalar_lea.sflag [#allocation3], %s183
        %s185 = sand.u32 %s29, 1
        %s186 = smul.addr %s185, 8
        %s187 = scalar_lea.vmem [#allocation2], %s186
        %p188 = pneg %p42
        %p189 = pneg %p39
        %p190 = pneg %p63
        %p191 = pneg %p60
        %p192 = pneg %p84
        %p193 = pneg %p81
        %p194 = pneg %p110
        %p195 = pneg %p107
        %s196 = sand.u32 %s97, 1
        %s197 = scalar_lea.sflag [#allocation4], %s196
        %s198 = sand.u32 %s97, 1
        %s199 = smul.addr %s198, 8
        %s200 = scalar_lea.vmem [#allocation7], %s199
        %v202 = vld [vmem:[%s174] sm:$0xff]
        %v203 = vpack.c.bf16 %v202, %v202
        %v204 = vld [vmem:[#allocation5] sm:$0xf]
        %v205 = vld [vmem:[#allocation5 + $0x4] sm:$0xf]
        %v206 = vld [vmem:[#allocation5 + $0x8] sm:$0xf]
        %v207 = vld [vmem:[#allocation5 + $0xc] sm:$0xf]
        %v208 = vld [vmem:[%s2] sm:$0x1]
        %v210 = vlaneseq
        %v211 = vshrl.u32 %v210, 7
        %v212 = vsub.s32 0, %v211
        %v213 = vrot.slane %v208, %v212
        %v219 = vunpack.c.l.b16 %v204
        %v220 = vunpack.c.l.b16 %v205
        %v221 = vunpack.c.l.b16 %v206
        %v222 = vunpack.c.l.b16 %v207
        %v223 = vpack.c.b16 %v220, %v219
        %v224 = vpack.c.b16 %v222, %v221
        %vm227 = vcmask 261120
        %v229 = vsel %vm227, %v203, 0
        %231 = vmatprep.subr.bf16.mxu0 0
        %232 = vmatpush1.bf16.msra.mxu0 %v223
        %233 = vmatprep.subr.bf16.mxu0 0
        %234 = vmatpush1.bf16.msra.mxu0 %v224
        %235 = vmatprep.subr.bf16.mxu0 0
        %236 = vmatpush1.bf16.msra.mxu0 0
        %237 = vmatprep.subr.bf16.mxu0 0
        %238 = vmatpush1.bf16.msra.mxu0 0
        %239 = vmatprep.subr.bf16.mxu0 0
        %240 = vmatpush1.bf16.msra.mxu0 0
        %241 = vmatprep.subr.bf16.mxu0 0
        %242 = vmatpush1.bf16.msra.mxu0 0
        %243 = vmatprep.subr.bf16.mxu0 0
        %244 = vmatpush1.bf16.msra.mxu0 0
        %245 = vmatprep.subr.bf16.mxu0 0
        %246 = vmatpush1.bf16.msra.mxu0 0
        %247 = vmatprep.subr.bf16.mxu0 0
        %248 = vmatpush1.bf16.msra.mxu0 0
        %249 = vmatprep.subr.bf16.mxu0 0
        %250 = vmatpush1.bf16.msra.mxu0 0
        %251 = vmatprep.subr.bf16.mxu0 0
        %252 = vmatpush1.bf16.msra.mxu0 0
        %253 = vmatprep.subr.bf16.mxu0 0
        %254 = vmatpush1.bf16.msra.mxu0 0
        %255 = vmatprep.subr.bf16.mxu0 0
        %256 = vmatpush1.bf16.msra.mxu0 0
        %257 = vmatprep.subr.bf16.mxu0 0
        %258 = vmatpush1.bf16.msra.mxu0 0
        %259 = vmatprep.subr.bf16.mxu0 0
        %260 = vmatpush1.bf16.msra.mxu0 0
        %261 = vmatprep.subr.bf16.mxu0 0
        %262 = vmatpush1.bf16.msra.mxu0 0
        %263 = vmatprep.mubr.bf16.mxu0 0
        %264 = vmatmul.mubr.bf16.gmra.mrb[0].mxu0 %v229
        %v265 = vpop.f32.mrb[0].mxu0
        %v266 = vadd.f32 %v213, %v265
        %v267 = vpop.f32.mrb[0].mxu0
        %v268 = vpop.f32.mrb[0].mxu0
        %v269 = vpop.f32.mrb[0].mxu0
        %270 = vdwg.mxu0
        %271 = vst [vmem:[%s200] sm:$0xff] %v266
        %s272 = sand.u32 %s97, 1
        %s273 = scalar_lea.sflag [#allocation4], %s272
        %s274 = sand.u32 %s97, 1
        %s275 = smul.addr %s274, 8
        %s276 = scalar_lea.vmem [#allocation7], %s275
        // Predicated region
        $region41: #{gmm_linear.1} parent=31 // pred_check
          %p277 = pneg %p107
        $region42: #{gmm_linear.1} parent=31 // pred_check_branch
          %279 = sbr.rel (%p277) target = $region44
        $region43: #{gmm_linear.1} parent=31 // pred_region
          %s281 = ssub.s32 128, 128
          %282 = vsyncadd %s273, %s281
          %s283 = smul.addr %s21, 128
          %s284 = scalar_lea.hbm %s3, %s283
          %s286 = sshll.u32 %s276, 4
          %s287 = int_to_ptr.vmem [resolvable:$true] %s286
          %289 = dma.vmem_to_hbm [thread:$0]  %s287, 128, %s284, %s273
        $region44: #{gmm_linear.1} parent=31 // pred_fallthru
          _
      $region32: #{gmm_linear.1} parent=5 // pred_fallthru
        _
      %p290 = scmp.le.s32.totalorder 2, %s16
      // Predicated region
      $region45: #{gmm_linear.1} parent=5 // pred_check
        %p291 = pneg %p290
      $region46: #{gmm_linear.1} parent=5 // pred_check_branch
        %293 = sbr.rel (%p291) target = $region48
      $region47: #{gmm_linear.1} parent=5 // pred_region
        %s294 = ssub.s32 %s16, 2
        // Predicated region
        $region49: #{gmm_linear.1} parent=47 // pred_check
          %p295 = pneg %p113
        $region50: #{gmm_linear.1} parent=47 // pred_check_branch
          %297 = sbr.rel (%p295) target = $region52
        $region51: #{gmm_linear.1} parent=47 // pred_region
          %s298 = sand.u32 %s98, 1
          %s299 = scalar_lea.sflag [#allocation4], %s298
          %s300 = sand.u32 %s98, 1
          %s301 = smul.addr %s300, 8
          %s302 = scalar_lea.vmem [#allocation7], %s301
          %303 = dma.done %s299, 128
        $region52: #{gmm_linear.1} parent=47 // pred_fallthru
          _
      $region48: #{gmm_linear.1} parent=5 // pred_fallthru
        _
    $region6: #{gmm_linear.1} parent=1 // loop_footer
      %s20 = sadd.s32 1, %s16
    $region7: #{gmm_linear.1} parent=1 // loop_footer_branch
      %15 = sbr.rel target = $region3
    $region8: #{gmm_linear.1} parent=1 // loop_exit
      _
    %304 = vsyncpa [#allocation3], 1
    %s305 = scalar_lea.sflag [#allocation3], 1
    %306 = vsyncpa %s305, 1
    %307 = vsyncpa [#allocation6], 1
    %308 = vsyncpa [#allocation4], 1
    %s309 = scalar_lea.sflag [#allocation4], 1
    %310 = vsyncpa %s309, 1

</llo_original>
